<compile_context>
chip_gen: v5e
topology: v5e:2x2
jax: 0.10.0
libtpu: 0.0.40
codegen_flags: <defaults>
</compile_context>

<pallas_src>
import jax
import jax.numpy as jnp
from jax import lax
from jax.experimental import pallas as pl
from jax.experimental.pallas import tpu as pltpu


def _round_up(x, m):
    return ((x + m - 1) // m) * m


# ---------------------------------------------------------------------------
# Plain-JAX glue: grouping utilities (mirror of the torch helpers)
# ---------------------------------------------------------------------------

def square_distance(src, dst):
    # src: [B, N, C], dst: [B, M, C] -> [B, N, M]
    dist = -2.0 * jnp.einsum("bnc,bmc->bnm", src, dst)
    dist = dist + jnp.sum(src ** 2, axis=-1)[:, :, None]
    dist = dist + jnp.sum(dst ** 2, axis=-1)[:, None, :]
    return dist


def index_points(points, idx):
    # points: [B, N, C], idx: [B, ...] -> [B, ..., C]
    return jax.vmap(lambda p, i: p[i])(points, idx)


def furthest_point_sample(xyz, npoint):
    # JAX re-implementation of pointnet2_utils.furthest_point_sample
    # (the CUDA kernel seeds with index 0).
    B, N, _ = xyz.shape

    def body(i, state):
        centroids, distance, farthest = state
        centroids = centroids.at[:, i].set(farthest)
        centroid = jnp.take_along_axis(xyz, farthest[:, None, None], axis=1)  # [B,1,3]
        dist = jnp.sum((xyz - centroid) ** 2, axis=-1)                        # [B,N]
        distance = jnp.minimum(distance, dist)
        farthest = jnp.argmax(distance, axis=-1).astype(jnp.int32)
        return centroids, distance, farthest

    centroids = jnp.zeros((B, npoint), jnp.int32)
    distance = jnp.full((B, N), 1e10, jnp.float32)
    farthest = jnp.zeros((B,), jnp.int32)
    centroids, _, _ = lax.fori_loop(0, npoint, body, (centroids, distance, farthest))
    return centroids


def query_ball_point(radius, nsample, xyz, new_xyz, nsample_out=None):
    """Reference ball query.  Optionally emits `nsample_out >= nsample` columns,
    where the extra columns duplicate the first neighbor (max-invariant padding
    done at the index level, so no extra HBM pass over the grouped slab)."""
    if nsample_out is None:
        nsample_out = nsample
    B, N, _ = xyz.shape
    S = new_xyz.shape[1]
    sqrdists = square_distance(new_xyz, xyz)                         # [B,S,N]
    group_idx = jnp.broadcast_to(jnp.arange(N, dtype=jnp.int32), (B, S, N))
    group_idx = jnp.where(sqrdists > radius ** 2, jnp.int32(N), group_idx)
    take = min(nsample_out, N)
    group_idx = jnp.sort(group_idx, axis=-1)[:, :, :take]
    if nsample_out > take:
        group_idx = jnp.concatenate(
            [group_idx,
             jnp.broadcast_to(group_idx[:, :, :1], (B, S, nsample_out - take))],
            axis=-1)
    group_first = group_idx[:, :, 0:1]
    pos = jnp.arange(nsample_out, dtype=jnp.int32)[None, None, :]
    invalid = (group_idx == jnp.int32(N)) | (pos >= nsample)
    group_idx = jnp.where(invalid, group_first, group_idx)
    return group_idx


# ---------------------------------------------------------------------------
# Tile planning / VMEM budgeting
# ---------------------------------------------------------------------------

def _device_vmem_plan():
    """Return (vmem budget for tile choice, vmem_limit_bytes or None)."""
    kind = ""
    try:
        kind = jax.devices()[0].device_kind.lower()
    except Exception:
        pass
    if "v7" in kind:
        # 64 MiB physical VMEM per TensorCore: leave headroom for Mosaic's
        # internal scratch and the pipeline's own temporaries.
        return 36 * 1024 * 1024, 52 * 1024 * 1024
    if "v5" in kind or "v6" in kind:
        # 128 MiB physical VMEM: large tiles amortize per-step overhead and
        # keep the MXU push cadence dense.
        return 80 * 1024 * 1024, 100 * 1024 * 1024
    # Unknown / older parts: stay near the conservative scoped default.
    return 12 * 1024 * 1024, None


def _choose_tiles(G, K, cin, w_eff, budget):
    """Pick (tg groups, kc samples) per grid step under a VMEM budget."""
    lane = 128
    cin_lane = _round_up(max(cin, 1), lane)            # VMEM lane padding of input
    co_pads = [int(w.shape[1]) for w in w_eff]
    max_co = max(co_pads)
    cout_pad = co_pads[-1]

    # VMEM cost model (what Mosaic actually allocates):
    #  * input tile: bf16, lane dim padded to 128, double-buffered
    #  * live f32 activations + bf16 matmul-input copy (~3x widest layer f32)
    #  * output tile: f32, double-buffered
    #  * weights/biases: fetched once but allocated double-buffered
    row_bytes = 2 * cin_lane * 2 + 3 * max_co * 4
    out_row_bytes = 2 * cout_pad * 4
    fixed_bytes = 2 * sum(int(w.size) * 2 for w in w_eff)
    fixed_bytes += 2 * sum(c * 4 for c in co_pads)

    G8 = _round_up(G, 8)
    K8 = _round_up(K, 8)

    # Keep >=2 group tiles when possible so a v7x megacore can shard the
    # "parallel" axis over both TensorCores (costs ~nothing on 1-TC chips).
    tg_cap = min(G8, 2048)
    if G8 >= 16:
        tg_cap = min(tg_cap, max(8, (G8 // 2) // 8 * 8))

    target_rows = 4096                        # rows per grid step feeding the MXU
    kc = min(K8, 512)                         # cover nsample in as few chunks as possible
    tg = min(tg_cap, max(8, (target_rows // kc) // 8 * 8))

    def est(tg_, kc_):
        return fixed_bytes + tg_ * out_row_bytes + tg_ * kc_ * row_bytes

    while est(tg, kc) > budget and tg > 8:
        tg = max(8, (tg // 2) // 8 * 8)
    while est(tg, kc) > budget and kc > 8:
        kc = max(8, (kc // 2) // 8 * 8)

    G_pad = _round_up(G, tg)
    K_pad = _round_up(K, kc)
    return tg, kc, G_pad, K_pad


# ---------------------------------------------------------------------------
# Wrapper-side slab construction (single gather pass, kernel row order)
# ---------------------------------------------------------------------------

def _grouped_features(xyz_t, points_t, new_xyz, idx, G_pad, kc):
    """Build the bf16 row slab [nk*G_pad*kc, Cin] in (k_chunk, group, j) order."""
    B, S, K_pad = idx.shape
    nk = K_pad // kc
    G = B * S
    idx_flat = idx.reshape(G, K_pad)
    centers = new_xyz.reshape(G, 3)
    batch_ids = jnp.repeat(jnp.arange(B, dtype=jnp.int32), S)
    if G_pad > G:
        pad = G_pad - G
        idx_flat = jnp.concatenate(
            [idx_flat, jnp.zeros((pad, K_pad), idx_flat.dtype)], axis=0)
        centers = jnp.concatenate(
            [centers, jnp.zeros((pad, 3), centers.dtype)], axis=0)
        batch_ids = jnp.concatenate(
            [batch_ids, jnp.zeros((pad,), batch_ids.dtype)], axis=0)
    # Re-order the *small* index arrays so the heavy gather directly emits the
    # rows in the order the kernel tiles over (no slab transpose).
    idx_r = idx_flat.reshape(G_pad, nk, kc).transpose(1, 0, 2)        # [nk,G_pad,kc]
    bid_r = jnp.broadcast_to(batch_ids[None, :, None], (nk, G_pad, kc))
    gx = xyz_t[bid_r, idx_r, :]                                        # [nk,G_pad,kc,3]
    gx = (gx - centers[None, :, None, :]).astype(jnp.bfloat16)
    if points_t is not None:
        gp = points_t[bid_r, idx_r, :].astype(jnp.bfloat16)
        feats = jnp.concatenate([gx, gp], axis=-1)
    else:
        feats = gx
    cin = feats.shape[-1]
    return feats.reshape(nk * G_pad * kc, cin)


def _grouped_features_all(xyz_t, points_t, K_pad, kc, G_pad):
    """group_all path: every point of every cloud is one group."""
    B, N, _ = xyz_t.shape
    nk = K_pad // kc
    feats = xyz_t if points_t is None else jnp.concatenate([xyz_t, points_t], -1)
    feats = feats.astype(jnp.bfloat16)                                 # [B,N,Cin]
    # Pad K with duplicates (max-invariant) and the group axis (discarded rows).
    feats = jnp.pad(feats, ((0, G_pad - B), (0, K_pad - N), (0, 0)), mode="edge")
    cin = feats.shape[-1]
    feats = feats.reshape(G_pad, nk, kc, cin).transpose(1, 0, 2, 3)
    return feats.reshape(nk * G_pad * kc, cin)


# ---------------------------------------------------------------------------
# Pallas kernel: stacked (1x1 conv + folded BN + ReLU) layers, running max
# over nsample chunks accumulated into the VMEM-resident output block.
# ---------------------------------------------------------------------------

def _make_mlp_max_kernel(num_layers, tg, kc, cout_pad):
    def kernel(x_ref, *args):
        out_ref = args[-1]
        wb = args[:-1]
        k = pl.program_id(1)

        h = x_ref[...]                                  # bf16 [tg*kc, Cin]
        for i in range(num_layers):
            w = wb[2 * i][...]                          # bf16 [Ci_pad, Co_pad]
            b = wb[2 * i + 1][...]                      # f32  [1, Co_pad]
            y = jnp.dot(h.astype(jnp.bfloat16), w,
                        preferred_element_type=jnp.float32)   # MXU, f32 acc
            h = jnp.maximum(y + b, 0.0)                 # bias + ReLU in f32 (VPU)

        # kc % 8 == 0 and cout_pad % 128 == 0 -> tile-aligned (free) view split.
        chunk_max = jnp.max(h.reshape(tg, kc, cout_pad), axis=1)      # [tg, Co_pad]

        @pl.when(k == 0)
        def _():
            out_ref[...] = chunk_max

        @pl.when(k > 0)
        def _():
            out_ref[...] = jnp.maximum(out_ref[...], chunk_max)       # VPU running max
    return kernel


def _run_mlp_max(x2, w_eff, b_eff, tg, kc, G_pad, vmem_limit):
    """x2: [nk*G_pad*kc, Cin] bf16 rows -> [G_pad, cout_pad] f32 (MLP + max)."""
    R, cin = x2.shape
    n_i = G_pad // tg
    n_k = R // (G_pad * kc)
    cout_pad = int(w_eff[-1].shape[1])
    num_layers = len(w_eff)

    kernel = _make_mlp_max_kernel(num_layers, tg, kc, cout_pad)

    # Row offset of block (i, k) is (k*G_pad + i*tg) * kc -> block index below.
    in_specs = [pl.BlockSpec((tg * kc, cin), lambda i, k: (k * n_i + i, 0))]
    wb_inputs = []
    for w, b in zip(w_eff, b_eff):
        in_specs.append(pl.BlockSpec(w.shape, lambda i, k: (0, 0)))
        in_specs.append(pl.BlockSpec(b.shape, lambda i, k: (0, 0)))
        wb_inputs.extend([w, b])

    flops = 2 * R * sum(int(w.shape[0]) * int(w.shape[1]) for w in w_eff)
    bytes_accessed = (int(x2.size) * 2
                      + sum(int(w.size) * 2 for w in w_eff)
                      + sum(int(b.size) * 4 for b in b_eff)
                      + G_pad * cout_pad * 4)

    out = pl.pallas_call(
        kernel,
        out_shape=jax.ShapeDtypeStruct((G_pad, cout_pad), jnp.float32),
        grid=(n_i, n_k),
        in_specs=in_specs,
        out_specs=pl.BlockSpec((tg, cout_pad), lambda i, k: (i, 0)),
        compiler_params=pltpu.CompilerParams(
            dimension_semantics=("parallel", "arbitrary"),
            vmem_limit_bytes=vmem_limit),
        cost_estimate=pl.CostEstimate(
            flops=flops, transcendentals=0, bytes_accessed=bytes_accessed),
    )(x2, *wb_inputs)
    return out


# ---------------------------------------------------------------------------
# Module wrapper
# ---------------------------------------------------------------------------

def init_params(key, in_channel, mlp):
    """Deterministic init mimicking nn.Conv2d / nn.BatchNorm2d defaults."""
    params = []
    last = in_channel
    for out_channel in mlp:
        key, kw, kb = jax.random.split(key, 3)
        bound = 1.0 / jnp.sqrt(float(last))
        w_conv = jax.random.uniform(kw, (out_channel, last), jnp.float32,
                                    minval=-bound, maxval=bound)   # conv weight [Co,Ci]
        b_conv = jax.random.uniform(kb, (out_channel,), jnp.float32,
                                    minval=-bound, maxval=bound)
        # BatchNorm2d defaults: gamma=1, beta=0, running_mean=0, running_var=1
        params.append(dict(w=w_conv, b=b_conv,
                           gamma=jnp.ones((out_channel,), jnp.float32),
                           beta=jnp.zeros((out_channel,), jnp.float32),
                           mean=jnp.zeros((out_channel,), jnp.float32),
                           var=jnp.ones((out_channel,), jnp.float32),
                           eps=1e-5))
        last = out_channel
    return params


def fold_bn(params, in_channel, lane=128):
    """Fold eval-mode BN into the 1x1-conv weight/bias.

    Weights are transposed to [Ci, Co], output-channel dims zero-padded to a
    multiple of 128 (lane-dense matmul N-dim / stores) and cast to bf16.  The
    raw input-channel dim (3+D) is NOT padded.  Biases stay f32.
    """
    # TODO(synk): train-mode BatchNorm (batch statistics) is not reproduced;
    # this uses eval-mode running stats.
    w_eff, b_eff = [], []
    ci_pad = in_channel
    for p in params:
        co = p["w"].shape[0]
        scale = p["gamma"] / jnp.sqrt(p["var"] + p["eps"])            # [Co]
        w = (p["w"] * scale[:, None]).T                               # [Ci, Co]
        b = (p["b"] - p["mean"]) * scale + p["beta"]                  # [Co]
        co_pad = _round_up(co, lane)
        wp = jnp.zeros((ci_pad, co_pad), jnp.float32)
        wp = wp.at[:w.shape[0], :co].set(w)
        bp = jnp.zeros((1, co_pad), jnp.float32).at[0, :co].set(b)
        w_eff.append(wp.astype(jnp.bfloat16))
        b_eff.append(bp)
        ci_pad = co_pad
    return w_eff, b_eff


def pointnet_set_abstraction_forward(xyz, points, params,
                                     npoint, radius, nsample, group_all):
    """
    xyz:    [B, 3, N]  (torch layout)
    points: [B, D, N] or None
    returns new_xyz [B, 3, S], new_points [B, Cout, S]   (torch layout)
    """
    xyz_t = jnp.transpose(xyz, (0, 2, 1))                             # [B,N,3]
    points_t = jnp.transpose(points, (0, 2, 1)) if points is not None else None
    B, N, _ = xyz_t.shape
    D = points_t.shape[-1] if points_t is not None else 0
    in_channel = 3 + D
    cout = params[-1]["w"].shape[0]
    w_eff, b_eff = fold_bn(params, in_channel)

    if group_all:
        S, K = 1, N
        new_xyz = jnp.zeros((B, 1, 3), xyz_t.dtype)
    else:
        S, K = npoint, nsample
        fps_idx = furthest_point_sample(xyz_t, npoint)                # [B,S]
        new_xyz = index_points(xyz_t, fps_idx)                        # [B,S,3]

    G = B * S
    budget, vmem_limit = _device_vmem_plan()
    tg, kc, G_pad, K_pad = _choose_tiles(G, K, in_channel, w_eff, budget)

    if group_all:
        x2 = _grouped_features_all(xyz_t, points_t, K_pad, kc, G_pad)
    else:
        idx = query_ball_point(radius, nsample, xyz_t, new_xyz, nsample_out=K_pad)
        x2 = _grouped_features(xyz_t, points_t, new_xyz, idx, G_pad, kc)

    out = _run_mlp_max(x2, w_eff, b_eff, tg, kc, G_pad, vmem_limit)   # [G_pad,Co_pad]
    feats = out[:G, :cout].reshape(B, S, cout)                        # [B,S,Cout]

    new_points_out = jnp.transpose(feats, (0, 2, 1))                  # [B,Cout,S]
    new_xyz_out = jnp.transpose(new_xyz, (0, 2, 1))                   # [B,3,S]
    return new_xyz_out, new_points_out


# ---------------------------------------------------------------------------
# Pure-JAX f32 reference (for a tolerance check against the bf16 kernel path)
# ---------------------------------------------------------------------------

def _reference_forward(xyz, points, params, npoint, radius, nsample, group_all):
    xyz_t = jnp.transpose(xyz, (0, 2, 1))
    points_t = jnp.transpose(points, (0, 2, 1)) if points is not None else None
    B = xyz_t.shape[0]
    if group_all:
        new_xyz = jnp.zeros((B, 1, 3), xyz_t.dtype)
        gp = xyz_t[:, None] if points_t is None else \
            jnp.concatenate([xyz_t, points_t], -1)[:, None]           # [B,1,N,C]
        new_points = gp
    else:
        fps_idx = furthest_point_sample(xyz_t, npoint)
        new_xyz = index_points(xyz_t, fps_idx)
        idx = query_ball_point(radius, nsample, xyz_t, new_xyz)
        gx = index_points(xyz_t, idx) - new_xyz[:, :, None, :]
        if points_t is not None:
            new_points = jnp.concatenate([gx, index_points(points_t, idx)], -1)
        else:
            new_points = gx
    h = new_points                                                    # [B,S,K,C]
    for p in params:
        scale = p["gamma"] / jnp.sqrt(p["var"] + p["eps"])
        w = p["w"] * scale[:, None]
        b = (p["b"] - p["mean"]) * scale + p["beta"]
        h = jnp.maximum(jnp.einsum("bskc,oc->bsko", h, w) + b, 0.0)
    feats = jnp.max(h, axis=2)                                        # [B,S,Cout]
    return jnp.transpose(new_xyz, (0, 2, 1)), jnp.transpose(feats, (0, 2, 1))


# ---------------------------------------------------------------------------
# Demo
# ---------------------------------------------------------------------------

if __name__ == "__main__":
    key = jax.random.PRNGKey(0)
    B, N, D = 2, 16, 4               # batch, input points, extra feature channels
    npoint, radius, nsample = 8, 0.5, 8
    in_channel = 3 + D               # grouped xyz (3) concat point features (D)
    mlp = [8, 16]

    k1, k2, k3 = jax.random.split(key, 3)
    xyz = jax.random.normal(k1, (B, 3, N), jnp.float32)               # [B, C, N]
    points = jax.random.normal(k2, (B, D, N), jnp.float32)            # [B, D, N]
    params = init_params(k3, in_channel, mlp)

    # group_all=False path (FPS + ball query grouping in JAX, MLP+max in Pallas)
    new_xyz, new_feat = pointnet_set_abstraction_forward(
        xyz, points, params, npoint, radius, nsample, group_all=False)
    jax.block_until_ready((new_xyz, new_feat))
    assert new_xyz.shape == (B, 3, npoint)
    assert new_feat.shape == (B, mlp[-1], npoint)

    ref_xyz, ref_feat = _reference_forward(
        xyz, points, params, npoint, radius, nsample, group_all=False)
    err = float(jnp.max(jnp.abs(new_feat - ref_feat)))
    assert err < 1e-1, f"grouped path mismatch vs f32 reference: {err}"

    # group_all=True path
    new_xyz_a, new_feat_a = pointnet_set_abstraction_forward(
        xyz, points, params, npoint, radius, nsample, group_all=True)
    jax.block_until_ready((new_xyz_a, new_feat_a))
    assert new_xyz_a.shape == (B, 3, 1)
    assert new_feat_a.shape == (B, mlp[-1], 1)

    ref_xyz_a, ref_feat_a = _reference_forward(
        xyz, points, params, npoint, radius, nsample, group_all=True)
    err_a = float(jnp.max(jnp.abs(new_feat_a - ref_feat_a)))
    assert err_a < 1e-1, f"group_all path mismatch vs f32 reference: {err_a}"

    print("KERNEL_OK")
</pallas_src>

<mosaic_0001>
module attributes {stable_mosaic.version = 11 : i64} {
  func.func @kernel(%arg0: i32, %arg1: i32, %arg2: memref<64x7xbf16, #tpu.memory_space<vmem>>, %arg3: memref<7x128xbf16, #tpu.memory_space<vmem>>, %arg4: memref<1x128xf32, #tpu.memory_space<vmem>>, %arg5: memref<128x128xbf16, #tpu.memory_space<vmem>>, %arg6: memref<1x128xf32, #tpu.memory_space<vmem>>, %arg7: memref<8x128xf32, #tpu.memory_space<vmem>>) attributes {dimension_semantics = [#tpu.dimension_semantics<parallel>, #tpu.dimension_semantics<arbitrary>], iteration_bounds = array<i64: 2, 1>, scalar_prefetch = 0 : i64, scratch_operands = 0 : i64, tpu.core_type = #tpu.core_type<tc>, window_params = [{transform_indices = @transform_0, window_bounds = array<i64: 64, 7>}, {pipeline_mode = #tpu.pipeline_mode<synchronous>, transform_indices = @transform_1, window_bounds = array<i64: 7, 128>}, {pipeline_mode = #tpu.pipeline_mode<synchronous>, transform_indices = @transform_2, window_bounds = array<i64: 1, 128>}, {pipeline_mode = #tpu.pipeline_mode<synchronous>, transform_indices = @transform_3, window_bounds = array<i64: 128, 128>}, {pipeline_mode = #tpu.pipeline_mode<synchronous>, transform_indices = @transform_4, window_bounds = array<i64: 1, 128>}, {transform_indices = @transform_5, window_bounds = array<i64: 8, 128>}]} {
    %c0 = arith.constant 0 : index
    %c0_0 = arith.constant 0 : index
    %0 = vector.load %arg2[%c0, %c0_0] : memref<64x7xbf16, #tpu.memory_space<vmem>>, vector<64x7xbf16>
    %c0_1 = arith.constant 0 : index
    %c0_2 = arith.constant 0 : index
    %1 = vector.load %arg3[%c0_1, %c0_2] : memref<7x128xbf16, #tpu.memory_space<vmem>>, vector<7x128xbf16>
    %c0_3 = arith.constant 0 : index
    %c0_4 = arith.constant 0 : index
    %2 = vector.load %arg4[%c0_3, %c0_4] : memref<1x128xf32, #tpu.memory_space<vmem>>, vector<1x128xf32>
    %cst = arith.constant dense<0.000000e+00> : vector<64x128xf32>
    %3 = tpu.matmul %0, %1, %cst {dimension_numbers = #tpu.dot_dimension_numbers<[1], [0], [0], [1], [0, 0, 1, 1], [], []>} : vector<64x7xbf16>, vector<7x128xbf16>, vector<64x128xf32> -> vector<64x128xf32>
    %4 = vector.broadcast %2 : vector<1x128xf32> to vector<64x128xf32>
    %5 = arith.addf %3, %4 : vector<64x128xf32>
    %cst_5 = arith.constant 0.000000e+00 : f32
    %6 = vector.broadcast %cst_5 : f32 to vector<64x128xf32>
    %7 = arith.maximumf %5, %6 : vector<64x128xf32>
    %c0_6 = arith.constant 0 : index
    %c0_7 = arith.constant 0 : index
    %8 = vector.load %arg5[%c0_6, %c0_7] : memref<128x128xbf16, #tpu.memory_space<vmem>>, vector<128x128xbf16>
    %c0_8 = arith.constant 0 : index
    %c0_9 = arith.constant 0 : index
    %9 = vector.load %arg6[%c0_8, %c0_9] : memref<1x128xf32, #tpu.memory_space<vmem>>, vector<1x128xf32>
    %10 = arith.truncf %7 : vector<64x128xf32> to vector<64x128xbf16>
    %cst_10 = arith.constant dense<0.000000e+00> : vector<64x128xf32>
    %11 = tpu.matmul %10, %8, %cst_10 {dimension_numbers = #tpu.dot_dimension_numbers<[1], [0], [0], [1], [0, 0, 1, 1], [], []>} : vector<64x128xbf16>, vector<128x128xbf16>, vector<64x128xf32> -> vector<64x128xf32>
    %12 = vector.broadcast %9 : vector<1x128xf32> to vector<64x128xf32>
    %13 = arith.addf %11, %12 : vector<64x128xf32>
    %cst_11 = arith.constant 0.000000e+00 : f32
    %14 = vector.broadcast %cst_11 : f32 to vector<64x128xf32>
    %15 = arith.maximumf %13, %14 : vector<64x128xf32>
    %16 = vector.shape_cast %15 : vector<64x128xf32> to vector<8x8x128xf32>
    %cst_12 = arith.constant dense<0xFF800000> : vector<8x128xf32>
    %17 = vector.multi_reduction <maximumf>, %16, %cst_12 [1] : vector<8x8x128xf32> to vector<8x128xf32>
    %c0_i32 = arith.constant 0 : i32
    %18 = arith.cmpi eq, %arg1, %c0_i32 : i32
    %19 = arith.extui %18 : i1 to i32
    %c0_i32_13 = arith.constant 0 : i32
    %20 = arith.cmpi ne, %19, %c0_i32_13 : i32
    scf.if %20 {
      %c0_16 = arith.constant 0 : index
      %c0_17 = arith.constant 0 : index
      %24 = vector.load %arg7[%c0_16, %c0_17] : memref<8x128xf32, #tpu.memory_space<vmem>>, vector<8x128xf32>
      tpu.vector_store %arg7[%c0_16, %c0_17], %17 {strides = array<i32>} : memref<8x128xf32, #tpu.memory_space<vmem>>, vector<8x128xf32>,
    } else {
    }
    %c0_i32_14 = arith.constant 0 : i32
    %21 = arith.cmpi sgt, %arg1, %c0_i32_14 : i32
    %22 = arith.extui %21 : i1 to i32
    %c0_i32_15 = arith.constant 0 : i32
    %23 = arith.cmpi ne, %22, %c0_i32_15 : i32
    scf.if %23 {
      %c0_16 = arith.constant 0 : index
      %c0_17 = arith.constant 0 : index
      %24 = vector.load %arg7[%c0_16, %c0_17] : memref<8x128xf32, #tpu.memory_space<vmem>>, vector<8x128xf32>
      %25 = arith.maximumf %24, %17 : vector<8x128xf32>
      %c0_18 = arith.constant 0 : index
      %c0_19 = arith.constant 0 : index
      %26 = vector.load %arg7[%c0_18, %c0_19] : memref<8x128xf32, #tpu.memory_space<vmem>>, vector<8x128xf32>
      tpu.vector_store %arg7[%c0_18, %c0_19], %25 {strides = array<i32>} : memref<8x128xf32, #tpu.memory_space<vmem>>, vector<8x128xf32>,
    } else {
    }
    return
  }
  func.func @transform_0(%arg0: i32, %arg1: i32) -> (i32, i32) {
    %c2_i32 = arith.constant 2 : i32
    %0 = arith.muli %arg1, %c2_i32 : i32
    %1 = arith.addi %0, %arg0 : i32
    %c0_i32 = arith.constant 0 : i32
    %c0_i32_0 = arith.constant 0 : i32
    return %1, %c0_i32 : i32, i32
  }
  func.func @transform_1(%arg0: i32, %arg1: i32) -> (i32, i32) {
    %c0_i32 = arith.constant 0 : i32
    %c0_i32_0 = arith.constant 0 : i32
    %c0_i32_1 = arith.constant 0 : i32
    return %c0_i32, %c0_i32_0 : i32, i32
  }
  func.func @transform_2(%arg0: i32, %arg1: i32) -> (i32, i32) {
    %c0_i32 = arith.constant 0 : i32
    %c0_i32_0 = arith.constant 0 : i32
    %c0_i32_1 = arith.constant 0 : i32
    return %c0_i32, %c0_i32_0 : i32, i32
  }
  func.func @transform_3(%arg0: i32, %arg1: i32) -> (i32, i32) {
    %c0_i32 = arith.constant 0 : i32
    %c0_i32_0 = arith.constant 0 : i32
    %c0_i32_1 = arith.constant 0 : i32
    return %c0_i32, %c0_i32_0 : i32, i32
  }
  func.func @transform_4(%arg0: i32, %arg1: i32) -> (i32, i32) {
    %c0_i32 = arith.constant 0 : i32
    %c0_i32_0 = arith.constant 0 : i32
    %c0_i32_1 = arith.constant 0 : i32
    return %c0_i32, %c0_i32_0 : i32, i32
  }
  func.func @transform_5(%arg0: i32, %arg1: i32) -> (i32, i32) {
    %c0_i32 = arith.constant 0 : i32
    %c0_i32_0 = arith.constant 0 : i32
    return %arg0, %c0_i32 : i32, i32
  }
}

</mosaic_0001>

<llo_original>
// kernel: tpu_custom_call.1
$region0: #{tpu_custom_call.1}
  #allocation0 [shape = 'u32[]', space=smem, size = 0x4, offset = 0x4, fixed_abs, tag = 'smem constant byte address 0x4 - core index']
  #allocation1 [shape = 'u32[72,128]{1,0:T(1,128)}', space=vmem, size = 0x9000, scoped, tag = 'internal scratch']
  %s0 = inlined_call_operand.vmem [shape: bf16[128,7], index: 0, kind: input, shape index: {}]
  %s1 = inlined_call_operand.vmem [shape: bf16[7,128], index: 1, kind: input, shape index: {}]
  %s2 = inlined_call_operand.vmem [shape: f32[1,128], index: 2, kind: input, shape index: {}]
  %s3 = inlined_call_operand.vmem [shape: bf16[128,128], index: 3, kind: input, shape index: {}]
  %s4 = inlined_call_operand.vmem [shape: f32[1,128], index: 4, kind: input, shape index: {}]
  %s5 = inlined_call_operand.hbm [shape: f32[16,128], index: 5, kind: output, shape index: {}]
  %s6 = sld [smem:[#allocation0]]
  $region61: #{tpu_custom_call.1} parent=0
    _
  %s8 = ssub.s32 1, %s6
  %s9 = scalar_select 0, %s8, %s6
  $region1: #{tpu_custom_call.1} parent=0
    #allocation2 [shape = 'u8[8192]{0}', space=vmem, size = 0x2000, scoped, tag = 'output window, operand 0']
    #allocation3 [shape = 's32[2]{0}', space=sflag, size = 0x8, scoped, tag = 'scoped memory for tpu_custom_call.1']
    %10 = vsyncpa [#allocation3], 0
    %s11 = scalar_lea.sflag [#allocation3], 1
    %12 = vsyncpa %s11, 0
    loop: start=0, step=1, limit=4
    $region2: #{tpu_custom_call.1} parent=1 // loop_pre_header
      _
    $region3: #{tpu_custom_call.1} parent=1 // loop_header
      %s14 = sphi 0, %s18
      %p15 = scmp.ge.s32.totalorder %s14, 4
      %s21 = sphi 0, %s33
      %s22 = sphi 0, %s29
      %s23 = sphi 0, %s21
      %s24 = sphi 0, %s22
      %s25 = sphi 0, %s23
      %s26 = sphi 0, %s24
      %s40 = sphi 0, %s42
      %s43 = sphi 0, %s40
      %s44 = sphi 0, %s43
      %s60 = sphi 0, %s44
      %s64 = sphi 0, %s64
      %s66 = sphi 0, %s64
      %s67 = sphi 0, %s66
      %s81 = sphi 0, %s67
      %s85 = sphi 0, %s85
      %s87 = sphi 0, %s85
      %s88 = sphi 0, %s87
      %s102 = sphi 0, %s88
      %s106 = sphi 0, %s106
      %s108 = sphi 0, %s106
      %s109 = sphi 0, %s108
      %s123 = sphi 0, %s109
      %s127 = sphi 0, %s127
      %s129 = sphi 0, %s127
      %s130 = sphi 0, %s129
      %s144 = sphi 0, %s130
      %s150 = sphi 0, %s152
      %s153 = sphi 0, %s150
      %s154 = sphi 0, %s153
      %s170 = sphi 0, %s154
    $region4: #{tpu_custom_call.1} parent=1 // loop_header_branch
      %17 = sbr.rel (%p15) target = $region8
    $region5: #{tpu_custom_call.1} parent=1 // loop_body
      %s19 = ssub.s32 %s14, 1
      %s20 = ssub.s32 %s14, 2
      %s27 = sadd.s32 1, %s22
      %p28 = scmp.ge.s32.totalorder %s27, 1
      %s29 = scalar_select %p28, 0, %s27
      %s30 = sadd.s32 1, %s21
      %s31 = scalar_select %p28, %s30, %s21
      %p32 = scmp.ge.s32.totalorder %s31, 2
      %s33 = scalar_select %p32, 0, %s31
      %s34 = smul.u32 %s22, 2
      %s35 = sadd.s32 %s34, %s21
      %s36 = smul.u32 %s29, 2
      %s37 = sadd.s32 %s36, %s33
      %s38 = ssub.s32 %s35, %s37
      %p39 = scmp.eq.s32.totalorder %s38, 0
      %s41 = sadd.s32 %s40, 1
      %s42 = scalar_select %p39, %s40, %s41
      %p45 = pneg %p39
      %p46 = scmp.eq.s32.totalorder %s14, 1
      %p47 = por %p45, %p46
      %p48 = scmp.ne.s32.totalorder %s40, %s43
      %p49 = scmp.eq.s32.totalorder %s14, 0
      %p50 = por %p48, %p49
      %p51 = scmp.ne.s32.totalorder %s40, %s43
      %p52 = scmp.eq.s32.totalorder %s19, 1
      %p53 = por %p51, %p52
      %p54 = scmp.ne.s32.totalorder %s43, %s44
      %p55 = scmp.eq.s32.totalorder %s19, 0
      %p56 = por %p54, %p55
      %p57 = scmp.ne.s32.totalorder %s43, %s44
      %p58 = scmp.eq.s32.totalorder %s20, 1
      %p59 = por %p57, %p58
      %p61 = scmp.ne.s32.totalorder %s44, %s60
      %p62 = scmp.eq.s32.totalorder %s20, 0
      %p63 = por %p61, %p62
      %s65 = sadd.s32 %s64, 1
      %p68 = scmp.eq.s32.totalorder %s14, 1
      %p69 = scmp.ne.s32.totalorder %s64, %s66
      %p70 = scmp.eq.s32.totalorder %s14, 0
      %p71 = por %p69, %p70
      %p72 = scmp.ne.s32.totalorder %s64, %s66
      %p73 = scmp.eq.s32.totalorder %s19, 1
      %p74 = por %p72, %p73
      %p75 = scmp.ne.s32.totalorder %s66, %s67
      %p76 = scmp.eq.s32.totalorder %s19, 0
      %p77 = por %p75, %p76
      %p78 = scmp.ne.s32.totalorder %s66, %s67
      %p79 = scmp.eq.s32.totalorder %s20, 1
      %p80 = por %p78, %p79
      %p82 = scmp.ne.s32.totalorder %s67, %s81
      %p83 = scmp.eq.s32.totalorder %s20, 0
      %p84 = por %p82, %p83
      %s86 = sadd.s32 %s85, 1
      %p89 = scmp.eq.s32.totalorder %s14, 1
      %p90 = scmp.ne.s32.totalorder %s85, %s87
      %p91 = scmp.eq.s32.totalorder %s14, 0
      %p92 = por %p90, %p91
      %p93 = scmp.ne.s32.totalorder %s85, %s87
      %p94 = scmp.eq.s32.totalorder %s19, 1
      %p95 = por %p93, %p94
      %p96 = scmp.ne.s32.totalorder %s87, %s88
      %p97 = scmp.eq.s32.totalorder %s19, 0
      %p98 = por %p96, %p97
      %p99 = scmp.ne.s32.totalorder %s87, %s88
      %p100 = scmp.eq.s32.totalorder %s20, 1
      %p101 = por %p99, %p100
      %p103 = scmp.ne.s32.totalorder %s88, %s102
      %p104 = scmp.eq.s32.totalorder %s20, 0
      %p105 = por %p103, %p104
      %s107 = sadd.s32 %s106, 1
      %p110 = scmp.eq.s32.totalorder %s14, 1
      %p111 = scmp.ne.s32.totalorder %s106, %s108
      %p112 = scmp.eq.s32.totalorder %s14, 0
      %p113 = por %p111, %p112
      %p114 = scmp.ne.s32.totalorder %s106, %s108
      %p115 = scmp.eq.s32.totalorder %s19, 1
      %p116 = por %p114, %p115
      %p117 = scmp.ne.s32.totalorder %s108, %s109
      %p118 = scmp.eq.s32.totalorder %s19, 0
      %p119 = por %p117, %p118
      %p120 = scmp.ne.s32.totalorder %s108, %s109
      %p121 = scmp.eq.s32.totalorder %s20, 1
      %p122 = por %p120, %p121
      %p124 = scmp.ne.s32.totalorder %s109, %s123
      %p125 = scmp.eq.s32.totalorder %s20, 0
      %p126 = por %p124, %p125
      %s128 = sadd.s32 %s127, 1
      %p131 = scmp.eq.s32.totalorder %s14, 1
      %p132 = scmp.ne.s32.totalorder %s127, %s129
      %p133 = scmp.eq.s32.totalorder %s14, 0
      %p134 = por %p132, %p133
      %p135 = scmp.ne.s32.totalorder %s127, %s129
      %p136 = scmp.eq.s32.totalorder %s19, 1
      %p137 = por %p135, %p136
      %p138 = scmp.ne.s32.totalorder %s129, %s130
      %p139 = scmp.eq.s32.totalorder %s19, 0
      %p140 = por %p138, %p139
      %p141 = scmp.ne.s32.totalorder %s129, %s130
      %p142 = scmp.eq.s32.totalorder %s20, 1
      %p143 = por %p141, %p142
      %p145 = scmp.ne.s32.totalorder %s130, %s144
      %p146 = scmp.eq.s32.totalorder %s20, 0
      %p147 = por %p145, %p146
      %s148 = ssub.s32 %s21, %s33
      %p149 = scmp.eq.s32.totalorder %s148, 0
      %s151 = sadd.s32 %s150, 1
      %s152 = scalar_select %p149, %s150, %s151
      %p155 = pneg %p149
      %p156 = scmp.eq.s32.totalorder %s14, 1
      %p157 = por %p155, %p156
      %p158 = scmp.ne.s32.totalorder %s150, %s153
      %p159 = scmp.eq.s32.totalorder %s14, 0
      %p160 = por %p158, %p159
      %p161 = scmp.ne.s32.totalorder %s150, %s153
      %p162 = scmp.eq.s32.totalorder %s19, 1
      %p163 = por %p161, %p162
      %p164 = scmp.ne.s32.totalorder %s153, %s154
      %p165 = scmp.eq.s32.totalorder %s19, 0
      %p166 = por %p164, %p165
      %p167 = scmp.ne.s32.totalorder %s153, %s154
      %p168 = scmp.eq.s32.totalorder %s20, 1
      %p169 = por %p167, %p168
      %p171 = scmp.ne.s32.totalorder %s154, %s170
      %p172 = scmp.eq.s32.totalorder %s20, 0
      %p173 = por %p171, %p172
      %p174 = scmp.le.s32.totalorder 1, %s14
      %p175 = scmp.lt.s32.totalorder %s14, 3
      %p176 = pnand %p174, %p175
      %p177 = pneg %p176
      // Predicated region
      $region9: #{tpu_custom_call.1} parent=5 // pred_check
        _
      $region10: #{tpu_custom_call.1} parent=5 // pred_check_branch
        %179 = sbr.rel (%p176) target = $region12
      $region11: #{tpu_custom_call.1} parent=5 // pred_region
        %s180 = ssub.s32 %s14, 1
        // Predicated region
        $region13: #{tpu_custom_call.1} parent=11 // pred_check
          %p181 = pneg %p77
        $region14: #{tpu_custom_call.1} parent=11 // pred_check_branch
          %183 = sbr.rel (%p181) target = $region16
        $region15: #{tpu_custom_call.1} parent=11 // pred_region
          _
        $region16: #{tpu_custom_call.1} parent=11 // pred_fallthru
          _
        // Predicated region
        $region17: #{tpu_custom_call.1} parent=11 // pred_check
          %p184 = pneg %p98
        $region18: #{tpu_custom_call.1} parent=11 // pred_check_branch
          %186 = sbr.rel (%p184) target = $region20
        $region19: #{tpu_custom_call.1} parent=11 // pred_region
          _
        $region20: #{tpu_custom_call.1} parent=11 // pred_fallthru
          _
        // Predicated region
        $region21: #{tpu_custom_call.1} parent=11 // pred_check
          %p187 = pneg %p119
        $region22: #{tpu_custom_call.1} parent=11 // pred_check_branch
          %189 = sbr.rel (%p187) target = $region24
        $region23: #{tpu_custom_call.1} parent=11 // pred_region
          _
        $region24: #{tpu_custom_call.1} parent=11 // pred_fallthru
          _
        // Predicated region
        $region25: #{tpu_custom_call.1} parent=11 // pred_check
          %p190 = pneg %p140
        $region26: #{tpu_custom_call.1} parent=11 // pred_check_branch
          %192 = sbr.rel (%p190) target = $region28
        $region27: #{tpu_custom_call.1} parent=11 // pred_region
          _
        $region28: #{tpu_custom_call.1} parent=11 // pred_fallthru
          _
      $region12: #{tpu_custom_call.1} parent=5 // pred_fallthru
        _
      %p193 = scmp.lt.s32.totalorder %s14, 2
      // Predicated region
      $region29: #{tpu_custom_call.1} parent=5 // pred_check
        %p194 = pneg %p193
      $region30: #{tpu_custom_call.1} parent=5 // pred_check_branch
        %196 = sbr.rel (%p194) target = $region32
      $region31: #{tpu_custom_call.1} parent=5 // pred_region
        // Predicated region
        $region33: #{tpu_custom_call.1} parent=31 // pred_check
          %p197 = pneg %p50
        $region34: #{tpu_custom_call.1} parent=31 // pred_check_branch
          %199 = sbr.rel (%p197) target = $region36
        $region35: #{tpu_custom_call.1} parent=31 // pred_region
          %s200 = smul.u32 %s22, 2
          %s201 = sadd.s32 %s200, %s21
          %s202 = smul.u32 8, %s201
          %p203 = scmp.lt.s32.totalorder %s202, 15
          %s204 = scalar_select %p203, %s202, 15
          %s205 = smul.addr %s204, 4
          %s206 = scalar_lea.vmem %s0, %s205
          %s207 = smul.u32 %s22, 2
          %s208 = sadd.s32 %s207, %s21
          %s209 = smul.u32 8, %s208
        $region36: #{tpu_custom_call.1} parent=31 // pred_fallthru
          _
      $region32: #{tpu_custom_call.1} parent=5 // pred_fallthru
        _
      %p210 = scmp.le.s32.totalorder 1, %s14
      %p211 = scmp.lt.s32.totalorder %s14, 3
      %p212 = pnand %p210, %p211
      %p213 = pneg %p212
      // Predicated region
      $region37: #{tpu_custom_call.1} parent=5 // pred_check
        _
      $region38: #{tpu_custom_call.1} parent=5 // pred_check_branch
        %215 = sbr.rel (%p212) target = $region40
      $region39: #{tpu_custom_call.1} parent=5 // pred_region
        %s216 = ssub.s32 %s14, 1
        %s217 = smul.u32 %s24, 2
        %s218 = sadd.s32 %s217, %s23
        %s219 = smul.u32 8, %s218
        %p220 = scmp.lt.s32.totalorder %s219, 15
        %s221 = scalar_select %p220, %s219, 15
        %s222 = smul.addr %s221, 4
        %s223 = scalar_lea.vmem %s0, %s222
        %p224 = pneg %p56
        %p225 = pneg %p53
        %p226 = pneg %p77
        %p227 = pneg %p74
        %p228 = pneg %p98
        %p229 = pneg %p95
        %p230 = pneg %p119
        %p231 = pneg %p116
        %p232 = pneg %p140
        %p233 = pneg %p137
        %p234 = pneg %p166
        %p235 = pneg %p163
        %s236 = sand.u32 %s153, 1
        %s237 = scalar_lea.sflag [#allocation3], %s236
        %s238 = sand.u32 %s153, 1
        %s239 = smul.addr %s238, 8
        %s240 = scalar_lea.vmem [#allocation2], %s239
        %s241 = smul.u32 %s24, 2
        %s242 = sadd.s32 %s241, %s23
        %s243 = smul.u32 8, %s242
        %p244 = scmp.lt.s32.totalorder %s243, 15
        %s245 = scalar_select %p244, %s243, 15
        %s246 = smul.addr %s245, 4
        %s247 = scalar_lea.vmem %s0, %s246
        %s248 = smul.u32 %s24, 2
        %s249 = sadd.s32 %s248, %s23
        %s250 = smul.u32 8, %s249
        %v252 = vld [vmem:[%s247] sm:$0xf]
        %v253 = vld [vmem:[%s247 + $0x4] sm:$0xf]
        %v254 = vld [vmem:[%s247 + $0x8] sm:$0xf]
        %v255 = vld [vmem:[%s247 + $0xc] sm:$0xf]
        %v256 = vld [vmem:[%s247 + $0x10] sm:$0xf]
        %v257 = vld [vmem:[%s247 + $0x14] sm:$0xf]
        %v258 = vld [vmem:[%s247 + $0x18] sm:$0xf]
        %v259 = vld [vmem:[%s247 + $0x1c] sm:$0xf]
        %v260 = vld [vmem:[%s1] sm:$0xf]
        %v261 = vld [vmem:[%s2] sm:$0x1]
        %v263 = vperm.slane %v261, 0
        %v273 = vunpack.c.l.b16 %v252
        %v274 = vunpack.c.l.b16 %v253
        %v275 = vunpack.c.l.b16 %v254
        %v276 = vunpack.c.l.b16 %v255
        %v277 = vunpack.c.l.b16 %v256
        %v278 = vunpack.c.l.b16 %v257
        %v279 = vunpack.c.l.b16 %v258
        %v280 = vunpack.c.l.b16 %v259
        %v281 = vpack.c.b16 %v274, %v273
        %v282 = vpack.c.b16 %v276, %v275
        %v283 = vpack.c.b16 %v278, %v277
        %v284 = vpack.c.b16 %v280, %v279
        %vm285 = vcmask 56320
        %v287 = vsel %vm285, %v281, 0
        %v290 = vsel %vm285, %v282, 0
        %v293 = vsel %vm285, %v283, 0
        %v296 = vsel %vm285, %v284, 0
        %vm298 = vcmask 1042432
        %vm299 = vcmask 1043456
        %v300 = vsel %vm298, 4294967295, 65535
        %v301 = vsel %vm299, %v300, 0
        %v303 = vand.u32 %v260, %v301
        %305 = vmatpush.bf16.msra.mxu0 0
        %306 = vmatpush.bf16.msra.mxu0 0
        %307 = vmatpush.bf16.msra.mxu0 0
        %308 = vmatpush.bf16.msra.mxu0 0
        %309 = vmatpush.bf16.msra.mxu0 0
        %310 = vmatpush.bf16.msra.mxu0 0
        %311 = vmatpush.bf16.msra.mxu0 0
        %312 = vmatpush.bf16.msra.mxu0 %v303
        %313 = vmatmul.bf16.gmra.mxu0 %v287
        %v314 = vpop.f32.mrf.mxu0
        %v315 = vadd.f32 %v263, %v314
        %v316 = vpop.f32.mrf.mxu0
        %v317 = vadd.f32 %v263, %v316
        %318 = vmatmul.bf16.gmra.mxu0 %v290
        %v319 = vpop.f32.mrf.mxu0
        %v320 = vadd.f32 %v263, %v319
        %v321 = vpop.f32.mrf.mxu0
        %v322 = vadd.f32 %v263, %v321
        %323 = vmatmul.bf16.gmra.mxu0 %v293
        %v324 = vpop.f32.mrf.mxu0
        %v325 = vadd.f32 %v263, %v324
        %v326 = vpop.f32.mrf.mxu0
        %v327 = vadd.f32 %v263, %v326
        %328 = vmatmul.bf16.gmra.mxu0 %v296
        %v329 = vpop.f32.mrf.mxu0
        %v330 = vadd.f32 %v263, %v329
        %v331 = vpop.f32.mrf.mxu0
        %v332 = vadd.f32 %v263, %v331
        %333 = vdwg.mxu0
        %v334 = vmax.f32 %v315, 0.0
        %v335 = vmax.f32 %v317, 0.0
        %v336 = vmax.f32 %v320, 0.0
        %v337 = vmax.f32 %v322, 0.0
        %v338 = vmax.f32 %v325, 0.0
        %v339 = vmax.f32 %v327, 0.0
        %v340 = vmax.f32 %v330, 0.0
        %v341 = vmax.f32 %v332, 0.0
        %v342 = vld [vmem:[%s3] sm:$0xf]
        %v343 = vld [vmem:[%s3 + $0x4] sm:$0xf]
        %v344 = vld [vmem:[%s3 + $0x8] sm:$0xf]
        %v345 = vld [vmem:[%s3 + $0xc] sm:$0xf]
        %v346 = vld [vmem:[%s3 + $0x10] sm:$0xf]
        %v347 = vld [vmem:[%s3 + $0x14] sm:$0xf]
        %v348 = vld [vmem:[%s3 + $0x18] sm:$0xf]
        %v349 = vld [vmem:[%s3 + $0x1c] sm:$0xf]
        %v350 = vld [vmem:[%s3 + $0x20] sm:$0xf]
        %v351 = vld [vmem:[%s3 + $0x24] sm:$0xf]
        %v352 = vld [vmem:[%s3 + $0x28] sm:$0xf]
        %v353 = vld [vmem:[%s3 + $0x2c] sm:$0xf]
        %v354 = vld [vmem:[%s3 + $0x30] sm:$0xf]
        %v355 = vld [vmem:[%s3 + $0x34] sm:$0xf]
        %v356 = vld [vmem:[%s3 + $0x38] sm:$0xf]
        %v357 = vld [vmem:[%s3 + $0x3c] sm:$0xf]
        %v358 = vld [vmem:[%s4] sm:$0x1]
        %v359 = vpack.c.bf16 %v335, %v334
        %v360 = vpack.c.bf16 %v337, %v336
        %v361 = vpack.c.bf16 %v339, %v338
        %v362 = vpack.c.bf16 %v341, %v340
        %v364 = vperm.slane %v358, 0
        %v382 = vunpack.c.l.b16 %v342
        %v383 = vunpack.c.l.b16 %v343
        %v384 = vunpack.c.l.b16 %v344
        %v385 = vunpack.c.l.b16 %v345
        %v386 = vunpack.c.l.b16 %v346
        %v387 = vunpack.c.l.b16 %v347
        %v388 = vunpack.c.l.b16 %v348
        %v389 = vunpack.c.l.b16 %v349
        %v390 = vunpack.c.l.b16 %v350
        %v391 = vunpack.c.l.b16 %v351
        %v392 = vunpack.c.l.b16 %v352
        %v393 = vunpack.c.l.b16 %v353
        %v394 = vunpack.c.l.b16 %v354
        %v395 = vunpack.c.l.b16 %v355
        %v396 = vunpack.c.l.b16 %v356
        %v397 = vunpack.c.l.b16 %v357
        %v398 = vpack.c.b16 %v383, %v382
        %v399 = vpack.c.b16 %v385, %v384
        %v400 = vpack.c.b16 %v387, %v386
        %v401 = vpack.c.b16 %v389, %v388
        %v402 = vpack.c.b16 %v391, %v390
        %v403 = vpack.c.b16 %v393, %v392
        %v404 = vpack.c.b16 %v395, %v394
        %v405 = vpack.c.b16 %v397, %v396
        %414 = vmatpush.bf16.msra.mxu0 %v405
        %415 = vmatpush.bf16.msra.mxu0 %v404
        %416 = vmatpush.bf16.msra.mxu0 %v403
        %417 = vmatpush.bf16.msra.mxu0 %v402
        %418 = vmatpush.bf16.msra.mxu0 %v401
        %419 = vmatpush.bf16.msra.mxu0 %v400
        %420 = vmatpush.bf16.msra.mxu0 %v399
        %421 = vmatpush.bf16.msra.mxu0 %v398
        %422 = vmatmul.bf16.gmra.mxu0 %v359
        %v423 = vpop.f32.mrf.mxu0
        %v424 = vadd.f32 %v364, %v423
        %v425 = vpop.f32.mrf.mxu0
        %v426 = vadd.f32 %v364, %v425
        %427 = vmatmul.bf16.gmra.mxu0 %v360
        %v428 = vpop.f32.mrf.mxu0
        %v429 = vadd.f32 %v364, %v428
        %v430 = vpop.f32.mrf.mxu0
        %v431 = vadd.f32 %v364, %v430
        %432 = vmatmul.bf16.gmra.mxu0 %v361
        %v433 = vpop.f32.mrf.mxu0
        %v434 = vadd.f32 %v364, %v433
        %v435 = vpop.f32.mrf.mxu0
        %v436 = vadd.f32 %v364, %v435
        %437 = vmatmul.bf16.gmra.mxu0 %v362
        %v438 = vpop.f32.mrf.mxu0
        %v439 = vadd.f32 %v364, %v438
        %v440 = vpop.f32.mrf.mxu0
        %v441 = vadd.f32 %v364, %v440
        %442 = vdwg.mxu0
        %v443 = vmax.f32 %v424, 0.0
        %v444 = vmax.f32 %v426, 0.0
        %v445 = vmax.f32 %v429, 0.0
        %v446 = vmax.f32 %v431, 0.0
        %v447 = vmax.f32 %v434, 0.0
        %v448 = vmax.f32 %v436, 0.0
        %v449 = vmax.f32 %v439, 0.0
        %v450 = vmax.f32 %v441, 0.0
        %v451 = vrot.slane %v443, 4
        %v452 = vmax.f32 %v443, %v451
        %v453 = vrot.slane %v452, 2
        %v454 = vmax.f32 %v452, %v453
        %v455 = vrot.slane %v454, 1
        %v456 = vmax.f32 %v454, %v455
        %v457 = vrot.slane %v444, 4
        %v458 = vmax.f32 %v444, %v457
        %v459 = vrot.slane %v458, 2
        %v460 = vmax.f32 %v458, %v459
        %v461 = vrot.slane %v460, 1
        %v462 = vmax.f32 %v460, %v461
        %v463 = vrot.slane %v445, 4
        %v464 = vmax.f32 %v445, %v463
        %v465 = vrot.slane %v464, 2
        %v466 = vmax.f32 %v464, %v465
        %v467 = vrot.slane %v466, 1
        %v468 = vmax.f32 %v466, %v467
        %v469 = vrot.slane %v446, 4
        %v470 = vmax.f32 %v446, %v469
        %v471 = vrot.slane %v470, 2
        %v472 = vmax.f32 %v470, %v471
        %v473 = vrot.slane %v472, 1
        %v474 = vmax.f32 %v472, %v473
        %v475 = vrot.slane %v447, 4
        %v476 = vmax.f32 %v447, %v475
        %v477 = vrot.slane %v476, 2
        %v478 = vmax.f32 %v476, %v477
        %v479 = vrot.slane %v478, 1
        %v480 = vmax.f32 %v478, %v479
        %v481 = vrot.slane %v448, 4
        %v482 = vmax.f32 %v448, %v481
        %v483 = vrot.slane %v482, 2
        %v484 = vmax.f32 %v482, %v483
        %v485 = vrot.slane %v484, 1
        %v486 = vmax.f32 %v484, %v485
        %v487 = vrot.slane %v449, 4
        %v488 = vmax.f32 %v449, %v487
        %v489 = vrot.slane %v488, 2
        %v490 = vmax.f32 %v488, %v489
        %v491 = vrot.slane %v490, 1
        %v492 = vmax.f32 %v490, %v491
        %v493 = vrot.slane %v450, 4
        %v494 = vmax.f32 %v450, %v493
        %v495 = vrot.slane %v494, 2
        %v496 = vmax.f32 %v494, %v495
        %v497 = vrot.slane %v496, 1
        %v498 = vmax.f32 %v496, %v497
        %p499 = scmp.eq.s32.totalorder %s24, 0
        // Predicated region
        $region41: #{tpu_custom_call.1} parent=39 // pred_check
          %p500 = pneg %p499
        $region42: #{tpu_custom_call.1} parent=39 // pred_check_branch
          %502 = sbr.rel (%p500) target = $region44
        $region43: #{tpu_custom_call.1} parent=39 // pred_region
          %vm511 = vcmask 1041409
          %v512 = vsel %vm511, %v462, %v456
          %vm513 = vcmask 1042434
          %v514 = vsel %vm513, %v468, %v512
          %vm515 = vcmask 1043459
          %v516 = vsel %vm515, %v474, %v514
          %vm517 = vcmask 1044484
          %v518 = vsel %vm517, %v480, %v516
          %vm519 = vcmask 1045509
          %v520 = vsel %vm519, %v486, %v518
          %vm521 = vcmask 1046534
          %v522 = vsel %vm521, %v492, %v520
          %vm523 = vcmask 1047559
          %v524 = vsel %vm523, %v498, %v522
          %526 = vst [vmem:[%s240] sm:$0xff] %v524
        $region44: #{tpu_custom_call.1} parent=39 // pred_fallthru
          _
        %p527 = scmp.gt.s32.totalorder %s24, 0
        // Predicated region
        $region45: #{tpu_custom_call.1} parent=39 // pred_check
          %p528 = pneg %p527
        $region46: #{tpu_custom_call.1} parent=39 // pred_check_branch
          %530 = sbr.rel (%p528) target = $region48
        $region47: #{tpu_custom_call.1} parent=39 // pred_region
          %v531 = vld [vmem:[%s240] sm:$0xff]
          %vm540 = vcmask 1041409
          %v541 = vsel %vm540, %v462, %v456
          %vm542 = vcmask 1042434
          %v543 = vsel %vm542, %v468, %v541
          %vm544 = vcmask 1043459
          %v545 = vsel %vm544, %v474, %v543
          %vm546 = vcmask 1044484
          %v547 = vsel %vm546, %v480, %v545
          %vm548 = vcmask 1045509
          %v549 = vsel %vm548, %v486, %v547
          %vm550 = vcmask 1046534
          %v551 = vsel %vm550, %v492, %v549
          %vm552 = vcmask 1047559
          %v553 = vsel %vm552, %v498, %v551
          %v555 = vmax.f32 %v531, %v553
          %556 = vst [vmem:[%s240] sm:$0xff] %v555
        $region48: #{tpu_custom_call.1} parent=39 // pred_fallthru
          _
        %s557 = sand.u32 %s153, 1
        %s558 = scalar_lea.sflag [#allocation3], %s557
        %s559 = sand.u32 %s153, 1
        %s560 = smul.addr %s559, 8
        %s561 = scalar_lea.vmem [#allocation2], %s560
        // Predicated region
        $region49: #{tpu_custom_call.1} parent=39 // pred_check
          %p562 = pneg %p163
        $region50: #{tpu_custom_call.1} parent=39 // pred_check_branch
          %564 = sbr.rel (%p562) target = $region52
        $region51: #{tpu_custom_call.1} parent=39 // pred_region
          %566 = vsyncadd %s558, 0
          %s567 = smul.addr %s23, 8
          %s568 = scalar_lea.hbm %s5, %s567
          %s570 = sshll.u32 %s561, 4
          %s571 = int_to_ptr.vmem [resolvable:$true] %s570
          %s572 = sshll.u32 %s568, 4
          %s573 = int_to_ptr.hbm [resolvable:$true] %s572
          %575 = dma.vmem_to_hbm [thread:$0]  %s571, 128, %s573, %s558
        $region52: #{tpu_custom_call.1} parent=39 // pred_fallthru
          _
      $region40: #{tpu_custom_call.1} parent=5 // pred_fallthru
        _
      %p576 = scmp.le.s32.totalorder 2, %s14
      // Predicated region
      $region53: #{tpu_custom_call.1} parent=5 // pred_check
        %p577 = pneg %p576
      $region54: #{tpu_custom_call.1} parent=5 // pred_check_branch
        %579 = sbr.rel (%p577) target = $region56
      $region55: #{tpu_custom_call.1} parent=5 // pred_region
        %s580 = ssub.s32 %s14, 2
        // Predicated region
        $region57: #{tpu_custom_call.1} parent=55 // pred_check
          %p581 = pneg %p169
        $region58: #{tpu_custom_call.1} parent=55 // pred_check_branch
          %583 = sbr.rel (%p581) target = $region60
        $region59: #{tpu_custom_call.1} parent=55 // pred_region
          %s584 = sand.u32 %s154, 1
          %s585 = scalar_lea.sflag [#allocation3], %s584
          %s586 = sand.u32 %s154, 1
          %s587 = smul.addr %s586, 8
          %s588 = scalar_lea.vmem [#allocation2], %s587
          %590 = dma.done %s585, 128
        $region60: #{tpu_custom_call.1} parent=55 // pred_fallthru
          _
      $region56: #{tpu_custom_call.1} parent=5 // pred_fallthru
        _
    $region6: #{tpu_custom_call.1} parent=1 // loop_footer
      %s18 = sadd.s32 1, %s14
    $region7: #{tpu_custom_call.1} parent=1 // loop_footer_branch
      %13 = sbr.rel target = $region3
    $region8: #{tpu_custom_call.1} parent=1 // loop_exit
      _
    %591 = vsyncpa [#allocation3], 1
    %s592 = scalar_lea.sflag [#allocation3], 1
    %593 = vsyncpa %s592, 1

</llo_original>
